<compile_context>
chip_gen: v6e
topology: v6e:2x2x1
jax: 0.10.0
libtpu: 0.0.40
codegen_flags: <defaults>
</compile_context>

<pallas_src>
import math

import numpy as np

import jax
import jax.numpy as jnp
from jax.experimental import pallas as pl
from jax.experimental.pallas import tpu as pltpu


_LANE = 128
_SUBLANE = 8
_TARGET_BLOCK_BYTES = 4 << 20      # per tiled f32 operand block
_VMEM_BUDGET = 40 << 20            # what the (double-buffered) plan may consume
_VMEM_CAP = 48 << 20               # hard cap handed to Mosaic (v7x-safe)


def _lens_kernel(xr_ref, xi_ref, l_ref, or_ref, oi_ref):
    """Elementwise complex multiply on the VPU: (xr + i xi) * (lr + i li)."""
    xr = xr_ref[...]
    xi = xi_ref[...]
    lens = l_ref[...]            # (2, tl): row 0 = Re(lens), row 1 = Im(lens)
    lr = lens[0:1, :]            # (1, tl) -> broadcasts over the sublane dim
    li = lens[1:2, :]
    or_ref[...] = xr * lr - xi * li
    oi_ref[...] = xr * li + xi * lr


def _round_down(x, m):
    return (x // m) * m


def _pick_tiles(rows, cols, itemsize, target):
    """Lane-dense (sublane, lane) tile whose f32 block stays <= `target` bytes.

    Each block dim is either a multiple of the native (8, 128) tile or the
    full array extent, so stores stay wide and unmasked.
    """
    tr_min = rows if rows < _SUBLANE else _SUBLANE
    if tr_min * cols * itemsize <= target:
        tl = cols                                     # full, lane-dense last dim
        max_tr = target // (cols * itemsize)
        if rows <= max_tr:
            tr = rows
        else:
            tr = max(_SUBLANE, _round_down(min(rows, max_tr), _SUBLANE))
        # Keep >=2 grid steps along the row axis when possible so both v7x
        # TensorCores get work (harmless single extra step on v5e/v6e).
        if tr >= rows and rows >= 2 * _SUBLANE:
            half = -(-rows // 2)                      # ceil(rows / 2)
            split = -(-half // _SUBLANE) * _SUBLANE   # round up to sublane mult
            if split < rows:
                tr = split
    else:
        # Columns alone overflow the budget: keep the minimum legal sublane
        # tile and shrink the lane tile so tr*tl*itemsize <= target.  (This
        # fixes the old path that forced tr=8 with a huge tl and blew past the
        # VMEM limit for H*W >= ~512K.)
        tr = tr_min
        tl = max(_LANE, _round_down(target // (max(tr, 1) * itemsize), _LANE))
        tl = min(tl, cols)
    return tr, tl


def _plan_tiles(rows, cols, itemsize=4):
    """Pick tiles and the VMEM footprint; shrink until the plan fits."""
    target = _TARGET_BLOCK_BYTES
    while True:
        tr, tl = _pick_tiles(rows, cols, itemsize, target)
        # 4 tiled f32 operands (xr, xi, out_re, out_im) double-buffered
        # + the small (2, tl) lens block double-buffered.
        need = 4 * 2 * tr * tl * itemsize + 2 * 2 * tl * itemsize
        if need <= _VMEM_BUDGET or target <= (256 << 10):
            return tr, tl, need
        target //= 2


def make_lens_function(whole_dim, pixel_size, focal_length, wave_lambda):
    """Matches Lens.__init__: exp(-1j*pi/(lambda*f) * (xx^2 + yy^2)) as (re, im)."""
    temp = np.arange(-np.ceil((whole_dim - 1) / 2),
                     np.floor((whole_dim - 1) / 2) + 0.5)
    x = temp * pixel_size
    xx, yy = np.meshgrid(x, x)
    phase = -math.pi / wave_lambda / focal_length * (xx ** 2 + yy ** 2)
    lens_re = jnp.asarray(np.cos(phase), dtype=jnp.float32)
    lens_im = jnp.asarray(np.sin(phase), dtype=jnp.float32)
    return lens_re, lens_im


def lens_forward(input_field: jax.Array, lens_re: jax.Array,
                 lens_im: jax.Array) -> jax.Array:
    """Pallas equivalent of Lens.forward: out = input_field * lens_function.

    input_field: complex64 (B, C, H, W);  lens_re/lens_im: float32 (H, W)
    returns:     complex64 (B, C, H, W)
    """
    B, C, H, W = input_field.shape
    rows, cols = B * C, H * W

    # Lane-dense 2D slabs; with allow_input_fusion XLA may fuse the real/imag
    # extraction straight into the Pallas input pipeline.
    xr = jnp.real(input_field).reshape(rows, cols)
    xi = jnp.imag(input_field).reshape(rows, cols)
    lens_ri = jnp.concatenate(
        [lens_re.reshape(1, cols), lens_im.reshape(1, cols)], axis=0)  # (2, cols)

    tr, tl, vmem_need = _plan_tiles(rows, cols)
    if vmem_need > _VMEM_CAP:
        raise ValueError(
            f"tile plan ({tr}x{tl}) needs {vmem_need} B VMEM > cap {_VMEM_CAP} B")

    grid = (pl.cdiv(rows, tr), pl.cdiv(cols, tl))

    x_spec = pl.BlockSpec((tr, tl), lambda i, j: (i, j))
    # When tl == cols (the common case) the lens block index is constant over
    # the whole grid, so it is DMA'd once and stays resident in VMEM.
    l_spec = pl.BlockSpec((2, tl), lambda i, j: (0, j))

    vmem_limit = int(min(_VMEM_CAP, max(16 << 20, int(vmem_need * 1.5))))

    out_re, out_im = pl.pallas_call(
        _lens_kernel,
        out_shape=(jax.ShapeDtypeStruct((rows, cols), jnp.float32),
                   jax.ShapeDtypeStruct((rows, cols), jnp.float32)),
        grid=grid,
        in_specs=[x_spec, x_spec, l_spec],
        out_specs=(x_spec, x_spec),
        compiler_params=pltpu.CompilerParams(
            dimension_semantics=("parallel", "parallel"),
            vmem_limit_bytes=vmem_limit,
            allow_input_fusion=[True, True, False],
        ),
    )(xr, xi, lens_ri)

    out = jax.lax.complex(out_re, out_im)
    return out.reshape(B, C, H, W)


if __name__ == "__main__":
    # Small, deterministic example consistent with the module:
    # a (B, C, whole_dim, whole_dim) complex field through a 16x16 lens.
    B, C = 2, 4
    whole_dim = 16
    pixel_size = 8e-6          # 8 um pixels
    focal_length = 0.1         # 10 cm focal length
    wave_lambda = 532e-9       # green light

    lens_re, lens_im = make_lens_function(
        whole_dim, pixel_size, focal_length, wave_lambda)

    key = jax.random.PRNGKey(0)
    k_re, k_im = jax.random.split(key)
    fr = jax.random.normal(k_re, (B, C, whole_dim, whole_dim), dtype=jnp.float32)
    fi = jax.random.normal(k_im, (B, C, whole_dim, whole_dim), dtype=jnp.float32)
    input_field = jax.lax.complex(fr, fi)          # complex64 NCHW field

    out = lens_forward(input_field, lens_re, lens_im)
    jax.block_until_ready(out)

    # correctness check against plain-JAX reference
    lens_c = jax.lax.complex(lens_re, lens_im)     # same lens values as kernel
    ref = input_field * lens_c
    assert out.shape == (B, C, whole_dim, whole_dim)
    assert out.dtype == jnp.complex64
    assert jnp.allclose(out, ref, atol=1e-5, rtol=1e-5)

    print("KERNEL_OK")
</pallas_src>

<mosaic_0001>
module attributes {stable_mosaic.version = 11 : i64} {
  func.func @_lens_kernel(%arg0: i32, %arg1: i32, %arg2: memref<8x256xf32, #tpu.memory_space<vmem>>, %arg3: memref<8x256xf32, #tpu.memory_space<vmem>>, %arg4: memref<2x256xf32, #tpu.memory_space<vmem>>, %arg5: memref<8x256xf32, #tpu.memory_space<vmem>>, %arg6: memref<8x256xf32, #tpu.memory_space<vmem>>) attributes {dimension_semantics = [#tpu.dimension_semantics<parallel>, #tpu.dimension_semantics<parallel>], iteration_bounds = array<i64: 1, 1>, scalar_prefetch = 0 : i64, scratch_operands = 0 : i64, tpu.core_type = #tpu.core_type<tc>, window_params = [{transform_indices = @transform_0, window_bounds = array<i64: 8, 256>}, {transform_indices = @transform_1, window_bounds = array<i64: 8, 256>}, {transform_indices = @transform_2, window_bounds = array<i64: 2, 256>}, {transform_indices = @transform_3, window_bounds = array<i64: 8, 256>}, {transform_indices = @transform_4, window_bounds = array<i64: 8, 256>}]} {
    %c0 = arith.constant 0 : index
    %c0_0 = arith.constant 0 : index
    %0 = vector.load %arg2[%c0, %c0_0] : memref<8x256xf32, #tpu.memory_space<vmem>>, vector<8x256xf32>
    %c0_1 = arith.constant 0 : index
    %c0_2 = arith.constant 0 : index
    %1 = vector.load %arg3[%c0_1, %c0_2] : memref<8x256xf32, #tpu.memory_space<vmem>>, vector<8x256xf32>
    %c0_3 = arith.constant 0 : index
    %c0_4 = arith.constant 0 : index
    %2 = vector.load %arg4[%c0_3, %c0_4] : memref<2x256xf32, #tpu.memory_space<vmem>>, vector<2x256xf32>
    %3 = vector.extract_strided_slice %2 {offsets = [0, 0], sizes = [1, 256], strides = [1, 1]} : vector<2x256xf32> to vector<1x256xf32>
    %4 = vector.extract_strided_slice %2 {offsets = [1, 0], sizes = [1, 256], strides = [1, 1]} : vector<2x256xf32> to vector<1x256xf32>
    %5 = vector.broadcast %3 : vector<1x256xf32> to vector<8x256xf32>
    %6 = arith.mulf %0, %5 : vector<8x256xf32>
    %7 = vector.broadcast %4 : vector<1x256xf32> to vector<8x256xf32>
    %8 = arith.mulf %1, %7 : vector<8x256xf32>
    %9 = arith.subf %6, %8 : vector<8x256xf32>
    %c0_5 = arith.constant 0 : index
    %c0_6 = arith.constant 0 : index
    %10 = vector.load %arg5[%c0_5, %c0_6] : memref<8x256xf32, #tpu.memory_space<vmem>>, vector<8x256xf32>
    tpu.vector_store %arg5[%c0_5, %c0_6], %9 {strides = array<i32>} : memref<8x256xf32, #tpu.memory_space<vmem>>, vector<8x256xf32>,
    %11 = vector.broadcast %4 : vector<1x256xf32> to vector<8x256xf32>
    %12 = arith.mulf %0, %11 : vector<8x256xf32>
    %13 = vector.broadcast %3 : vector<1x256xf32> to vector<8x256xf32>
    %14 = arith.mulf %1, %13 : vector<8x256xf32>
    %15 = arith.addf %12, %14 : vector<8x256xf32>
    %c0_7 = arith.constant 0 : index
    %c0_8 = arith.constant 0 : index
    %16 = vector.load %arg6[%c0_7, %c0_8] : memref<8x256xf32, #tpu.memory_space<vmem>>, vector<8x256xf32>
    tpu.vector_store %arg6[%c0_7, %c0_8], %15 {strides = array<i32>} : memref<8x256xf32, #tpu.memory_space<vmem>>, vector<8x256xf32>,
    return
  }
  func.func @transform_0(%arg0: i32, %arg1: i32) -> (i32, i32) {
    %c0_i32 = arith.constant 0 : i32
    return %arg0, %arg1 : i32, i32
  }
  func.func @transform_1(%arg0: i32, %arg1: i32) -> (i32, i32) {
    %c0_i32 = arith.constant 0 : i32
    return %arg0, %arg1 : i32, i32
  }
  func.func @transform_2(%arg0: i32, %arg1: i32) -> (i32, i32) {
    %c0_i32 = arith.constant 0 : i32
    %c0_i32_0 = arith.constant 0 : i32
    return %c0_i32, %arg1 : i32, i32
  }
  func.func @transform_3(%arg0: i32, %arg1: i32) -> (i32, i32) {
    %c0_i32 = arith.constant 0 : i32
    return %arg0, %arg1 : i32, i32
  }
  func.func @transform_4(%arg0: i32, %arg1: i32) -> (i32, i32) {
    %c0_i32 = arith.constant 0 : i32
    return %arg0, %arg1 : i32, i32
  }
}

</mosaic_0001>

<llo_original>
// kernel: tpu_custom_call.1
$region0: #{tpu_custom_call.1}
  #allocation0 [shape = 'u32[]', space=smem, size = 0x4, offset = 0x4, fixed_abs, tag = 'smem constant byte address 0x4 - core index']
  #allocation1 [shape = 'u32[144,128]{1,0:T(1,128)}', space=vmem, size = 0x12000, scoped, tag = 'internal scratch']
  %s0 = inlined_call_operand.hbm [shape: f32[8,256], index: 0, kind: input, shape index: {}]
  %s1 = inlined_call_operand.hbm [shape: f32[8,256], index: 1, kind: input, shape index: {}]
  %s2 = inlined_call_operand.hbm [shape: f32[2,256], index: 2, kind: input, shape index: {}]
  %s3 = inlined_call_operand.hbm [shape: f32[8,256], index: 3, kind: output, shape index: {0}]
  %s4 = inlined_call_operand.hbm [shape: f32[8,256], index: 4, kind: output, shape index: {1}]
  %5 = xla_tuple %s3, %s4
  %s6 = sld [smem:[#allocation0]]
  $region42: #{tpu_custom_call.1} parent=0
    _
  %s8 = ssub.s32 1, %s6
  %s9 = scalar_select 0, %s8, %s6
  $region1: #{tpu_custom_call.1} parent=0
    #allocation2 [shape = 'u8[8192]{0}', space=vmem, size = 0x2000, scoped, tag = 'input window, operand 0, single buffered']
    #allocation3 [shape = 's32[1]{0}', space=sflag, size = 0x4, scoped, tag = 'scoped memory for tpu_custom_call.1']
    #allocation4 [shape = 's32[1]{0}', space=sflag, size = 0x4, scoped, tag = 'scoped memory for tpu_custom_call.1']
    #allocation5 [shape = 'u8[8192]{0}', space=vmem, size = 0x2000, scoped, tag = 'input window, operand 1, single buffered']
    #allocation6 [shape = 's32[1]{0}', space=sflag, size = 0x4, scoped, tag = 'scoped memory for tpu_custom_call.1']
    #allocation7 [shape = 'u8[2048]{0}', space=vmem, size = 0x800, scoped, tag = 'input window, operand 2, single buffered']
    #allocation8 [shape = 'u8[8192]{0}', space=vmem, size = 0x2000, scoped, tag = 'output window, operand 0, single buffered']
    #allocation9 [shape = 'u8[8192]{0}', space=vmem, size = 0x2000, scoped, tag = 'output window, operand 1, single buffered']
    #allocation10 [shape = 's32[1]{0}', space=sflag, size = 0x4, scoped, tag = 'scoped memory for tpu_custom_call.1']
    %10 = vsyncpa [#allocation3], 0
    %11 = vsyncpa [#allocation6], 0
    %12 = vsyncpa [#allocation4], 0
    %13 = vsyncpa [#allocation10], 0
    // Predicated region
    $region2: #{tpu_custom_call.1} parent=1 // pred_check
      _
    $region3: #{tpu_custom_call.1} parent=1 // pred_check_branch
      %15 = sbr.rel (0) target = $region5
    $region4: #{tpu_custom_call.1} parent=1 // pred_region
      %s17 = ssub.s32 256, 256
      %18 = vsyncadd [#allocation3], %s17
      %s20 = sshll.u32 [#allocation2], 4
      %s21 = int_to_ptr.vmem [resolvable:$true] %s20
      %23 = dma.hbm_to_vmem [thread:$0]  %s0, 256, %s21, [#allocation3]
    $region5: #{tpu_custom_call.1} parent=1 // pred_fallthru
      _
    // Predicated region
    $region6: #{tpu_custom_call.1} parent=1 // pred_check
      _
    $region7: #{tpu_custom_call.1} parent=1 // pred_check_branch
      %25 = sbr.rel (0) target = $region9
    $region8: #{tpu_custom_call.1} parent=1 // pred_region
      %s27 = ssub.s32 256, 256
      %28 = vsyncadd [#allocation6], %s27
      %s30 = sshll.u32 [#allocation5], 4
      %s31 = int_to_ptr.vmem [resolvable:$true] %s30
      %33 = dma.hbm_to_vmem [thread:$0]  %s1, 256, %s31, [#allocation6]
    $region9: #{tpu_custom_call.1} parent=1 // pred_fallthru
      _
    // Predicated region
    $region10: #{tpu_custom_call.1} parent=1 // pred_check
      _
    $region11: #{tpu_custom_call.1} parent=1 // pred_check_branch
      %35 = sbr.rel (0) target = $region13
    $region12: #{tpu_custom_call.1} parent=1 // pred_region
      %s37 = ssub.s32 64, 64
      %38 = vsyncadd [#allocation6], %s37
      %s40 = sshll.u32 [#allocation7], 4
      %s41 = int_to_ptr.vmem [resolvable:$true] %s40
      %43 = dma.hbm_to_vmem [thread:$0]  %s2, 64, %s41, [#allocation6]
    $region13: #{tpu_custom_call.1} parent=1 // pred_fallthru
      _
    // Predicated region
    $region14: #{tpu_custom_call.1} parent=1 // pred_check
      _
    $region15: #{tpu_custom_call.1} parent=1 // pred_check_branch
      %45 = sbr.rel (0) target = $region17
    $region16: #{tpu_custom_call.1} parent=1 // pred_region
      %46 = dma.done [#allocation3], 256
    $region17: #{tpu_custom_call.1} parent=1 // pred_fallthru
      _
    // Predicated region
    $region18: #{tpu_custom_call.1} parent=1 // pred_check
      _
    $region19: #{tpu_custom_call.1} parent=1 // pred_check_branch
      %48 = sbr.rel (0) target = $region21
    $region20: #{tpu_custom_call.1} parent=1 // pred_region
      %49 = dma.done [#allocation6], 256
    $region21: #{tpu_custom_call.1} parent=1 // pred_fallthru
      _
    // Predicated region
    $region22: #{tpu_custom_call.1} parent=1 // pred_check
      _
    $region23: #{tpu_custom_call.1} parent=1 // pred_check_branch
      %51 = sbr.rel (0) target = $region25
    $region24: #{tpu_custom_call.1} parent=1 // pred_region
      %52 = dma.done [#allocation6], 64
    $region25: #{tpu_custom_call.1} parent=1 // pred_fallthru
      _
    %v53 = vld [vmem:[#allocation2] sm:$0xff]
    %v54 = vld [vmem:[#allocation2 + $0x8] sm:$0xff]
    %v55 = vld [vmem:[#allocation5] sm:$0xff]
    %v56 = vld [vmem:[#allocation5 + $0x8] sm:$0xff]
    %v57 = vld [vmem:[#allocation7] sm:$0xf]
    %v59 = vlaneseq
    %v60 = vshrl.u32 %v59, 7
    %v61 = vsub.s32 0, %v60
    %v62 = vrot.slane %v57, %v61
    %v63 = vlaneseq
    %v64 = vshrl.u32 %v63, 7
    %v65 = vsub.s32 2, %v64
    %v66 = vrot.slane %v57, %v65
    %v69 = vlaneseq
    %v70 = vshrl.u32 %v69, 7
    %v71 = vsub.s32 0, %v70
    %v72 = vrot.slane %v62, %v71
    %v73 = vlaneseq
    %v74 = vshrl.u32 %v73, 7
    %v75 = vsub.s32 0, %v74
    %v76 = vrot.slane %v66, %v75
    %v77 = vmul.f32 %v53, %v72
    %v78 = vmul.f32 %v54, %v76
    %v79 = vlaneseq
    %v80 = vshrl.u32 %v79, 7
    %v81 = vsub.s32 1, %v80
    %v82 = vrot.slane %v57, %v81
    %v83 = vlaneseq
    %v84 = vshrl.u32 %v83, 7
    %v85 = vsub.s32 3, %v84
    %v86 = vrot.slane %v57, %v85
    %v89 = vlaneseq
    %v90 = vshrl.u32 %v89, 7
    %v91 = vsub.s32 1, %v90
    %v92 = vrot.slane %v82, %v91
    %v93 = vlaneseq
    %v94 = vshrl.u32 %v93, 7
    %v95 = vsub.s32 1, %v94
    %v96 = vrot.slane %v86, %v95
    %v97 = vmul.f32 %v55, %v92
    %v98 = vmul.f32 %v56, %v96
    %v99 = vsub.f32 %v77, %v97
    %v100 = vsub.f32 %v78, %v98
    %101 = vst [vmem:[#allocation8] sm:$0xff] %v99
    %102 = vst [vmem:[#allocation8 + $0x8] sm:$0xff] %v100
    %v103 = vmul.f32 %v53, %v92
    %v104 = vmul.f32 %v54, %v96
    %v105 = vmul.f32 %v55, %v72
    %v106 = vmul.f32 %v56, %v76
    %v107 = vadd.f32 %v103, %v105
    %v108 = vadd.f32 %v104, %v106
    %109 = vst [vmem:[#allocation9] sm:$0xff] %v107
    %110 = vst [vmem:[#allocation9 + $0x8] sm:$0xff] %v108
    // Predicated region
    $region26: #{tpu_custom_call.1} parent=1 // pred_check
      _
    $region27: #{tpu_custom_call.1} parent=1 // pred_check_branch
      %112 = sbr.rel (0) target = $region29
    $region28: #{tpu_custom_call.1} parent=1 // pred_region
      %s114 = ssub.s32 256, 256
      %115 = vsyncadd [#allocation4], %s114
      %s117 = sshll.u32 [#allocation8], 4
      %s118 = int_to_ptr.vmem [resolvable:$true] %s117
      %120 = dma.vmem_to_hbm [thread:$0]  %s118, 256, %s3, [#allocation4]
    $region29: #{tpu_custom_call.1} parent=1 // pred_fallthru
      _
    // Predicated region
    $region30: #{tpu_custom_call.1} parent=1 // pred_check
      _
    $region31: #{tpu_custom_call.1} parent=1 // pred_check_branch
      %122 = sbr.rel (0) target = $region33
    $region32: #{tpu_custom_call.1} parent=1 // pred_region
      %s124 = ssub.s32 256, 256
      %125 = vsyncadd [#allocation10], %s124
      %s127 = sshll.u32 [#allocation9], 4
      %s128 = int_to_ptr.vmem [resolvable:$true] %s127
      %130 = dma.vmem_to_hbm [thread:$0]  %s128, 256, %s4, [#allocation10]
    $region33: #{tpu_custom_call.1} parent=1 // pred_fallthru
      _
    // Predicated region
    $region34: #{tpu_custom_call.1} parent=1 // pred_check
      _
    $region35: #{tpu_custom_call.1} parent=1 // pred_check_branch
      %132 = sbr.rel (0) target = $region37
    $region36: #{tpu_custom_call.1} parent=1 // pred_region
      %133 = dma.done [#allocation4], 256
    $region37: #{tpu_custom_call.1} parent=1 // pred_fallthru
      _
    // Predicated region
    $region38: #{tpu_custom_call.1} parent=1 // pred_check
      _
    $region39: #{tpu_custom_call.1} parent=1 // pred_check_branch
      %135 = sbr.rel (0) target = $region41
    $region40: #{tpu_custom_call.1} parent=1 // pred_region
      %136 = dma.done [#allocation10], 256
    $region41: #{tpu_custom_call.1} parent=1 // pred_fallthru
      _
    %137 = vsyncpa [#allocation3], 1
    %138 = vsyncpa [#allocation6], 1
    %139 = vsyncpa [#allocation4], 1
    %140 = vsyncpa [#allocation10], 1

</llo_original>
